<compile_context>
chip_gen: v7x
topology: tpu7x:2x2x1
jax: 0.10.0
libtpu: 0.0.40
codegen_flags: <defaults>
</compile_context>

<pallas_src>
import functools

import jax
import jax.numpy as jnp
from jax import lax
from jax.experimental import pallas as pl
from jax.experimental.pallas import tpu as pltpu


def _vq_kernel(hw, tm, z_ref, m2e_ref, e_t_ref, e_sq_ref, qT_ref, idx_ref,
               sse_ref):
    zT = z_ref[...].astype(jnp.float32)          # (D, TM)   z^T tile (lane-dense)
    m2e = m2e_ref[...].astype(jnp.float32)       # (K, D)    -2 * codebook
    e_t = e_t_ref[...].astype(jnp.float32)       # (D, K)    codebook^T
    e_sq = e_sq_ref[...].astype(jnp.float32)     # (K, 1)    |e_k|^2 column

    k = m2e.shape[0]

    # Reduced squared distances in transposed layout:
    #   d'[k, c] = |e_k|^2 - 2 e_k . z_c      (per-column |z_c|^2 dropped —
    # argmin over k is invariant to it).      -> (K, TM)
    d = e_sq + jnp.dot(m2e, zT, preferred_element_type=jnp.float32)

    # First-occurrence argmin over the codebook (sublane) axis; matches
    # torch.argmin / jnp.argmin tie-breaking.
    iota = lax.broadcasted_iota(jnp.int32, d.shape, 0)                 # (K, TM)
    d_min = jnp.min(d, axis=0, keepdims=True)                          # (1, TM)
    idx_row = jnp.min(jnp.where(d == d_min, iota, k), axis=0,
                      keepdims=True)                                   # (1, TM)
    idx_ref[...] = idx_row                                             # lane-dense

    # Codebook lookup produced directly in (D, TM) layout -> lane-dense store.
    onehot = (iota == idx_row).astype(jnp.float32)                     # (K, TM)
    qT = jnp.dot(e_t, onehot, preferred_element_type=jnp.float32)      # (D, TM)
    qT_ref[...] = qT.astype(qT_ref.dtype)

    # Per-tile partial SSE computed directly from (q - z): numerically safe,
    # only (D, TM) extra work.  Columns past HW (partial trailing block) hold
    # garbage -> masked to 0.
    diff = qT - zT                                                     # (D, TM)
    col = tm * pl.program_id(1) + lax.broadcasted_iota(
        jnp.int32, (1, zT.shape[1]), 1)                                # (1, TM)
    sq = jnp.sum(diff * diff, axis=0, keepdims=True)                   # (1, TM)
    sq = jnp.where(col < hw, sq, 0.0)
    sse_ref[...] = jnp.sum(sq, axis=1, keepdims=True)[None, None]      # (1,1,1,1)


def vector_quantizer_forward(z, embedding, *, tm=1024):
    """z: (B, C, H, W) float32, embedding: (K, D) float32 with D == C."""
    B, C, H, W = z.shape
    K, D = embedding.shape
    assert C == D, "channel dim must equal embedding_dim"
    assert tm % 128 == 0, "spatial tile must be a multiple of 128 (lane width)"

    HW = H * W
    z3 = z.reshape(B, D, HW)         # NCHW-native view; no transpose, no copy

    # Spatial tile: keep the block lane-dim either a multiple of 128 or the
    # full extent; a non-dividing extent is handled by a partial trailing block.
    if HW % 128 == 0:
        tm_eff = min(tm, HW)
    elif HW <= tm:
        tm_eff = HW                  # one full-extent block
    else:
        tm_eff = tm                  # partial (masked) trailing block
    num_tiles = pl.cdiv(HW, tm_eff)

    # Grid-invariant codebook tensors, hoisted out of the kernel.  Folding the
    # -2 here is a one-time (K, D) op, not per-tile VPU work.
    emb_f32 = embedding.astype(jnp.float32)
    m2e = -2.0 * emb_f32                                        # (K, D)
    e_t = jnp.transpose(emb_f32)                                # (D, K)
    e_sq = jnp.sum(emb_f32 * emb_f32, axis=1, keepdims=True)    # (K, 1)

    # TODO(synk): for large codebooks (K in the thousands), add a K grid axis
    # with running min/argmin scratch and set vmem_limit_bytes explicitly
    # (v7x: 64 MiB physical / 32 MiB default scoped; v5e: 16 MiB default).
    qT, idx, sse_parts = pl.pallas_call(
        functools.partial(_vq_kernel, HW, tm_eff),
        out_shape=(
            jax.ShapeDtypeStruct((B, D, HW), z.dtype),          # quantized^T
            jax.ShapeDtypeStruct((B, 1, HW), jnp.int32),        # indices
            jax.ShapeDtypeStruct((B, num_tiles, 1, 1), jnp.float32),  # SSE parts
        ),
        grid_spec=pltpu.PrefetchScalarGridSpec(
            num_scalar_prefetch=0,
            grid=(B, num_tiles),
            in_specs=[
                pl.BlockSpec((None, D, tm_eff), lambda b, i: (b, 0, i)),  # z^T
                pl.BlockSpec((K, D), lambda b, i: (0, 0)),      # -2*E  (invariant)
                pl.BlockSpec((D, K), lambda b, i: (0, 0)),      # E^T   (invariant)
                pl.BlockSpec((K, 1), lambda b, i: (0, 0)),      # |e|^2 (invariant)
            ],
            out_specs=(
                pl.BlockSpec((None, D, tm_eff), lambda b, i: (b, 0, i)),
                pl.BlockSpec((None, 1, tm_eff), lambda b, i: (b, 0, i)),
                pl.BlockSpec((1, 1, 1, 1), lambda b, i: (b, i, 0, 0)),
            ),
        ),
        compiler_params=pltpu.CompilerParams(
            dimension_semantics=("parallel", "parallel")),      # no revisits
    )(z3, m2e, e_t, e_sq)

    mse = jnp.sum(sse_parts) / jnp.float32(B * HW * D)
    quantized = qT.reshape(B, D, H, W)                          # NCHW, free
    codebook_loss = mse     # F.mse_loss(quantized, z.detach()) — same forward value
    commitment_loss = mse   # F.mse_loss(quantized.detach(), z) — same forward value
    encoding_indices = idx.reshape(B, H, W)
    return quantized, codebook_loss, commitment_loss, encoding_indices


def _check(z, embedding, quantized, codebook_loss, commitment_loss, idx):
    """Pure-JAX reference check mirroring the PyTorch module's forward."""
    B, C, H, W = z.shape
    z_flat = jnp.transpose(z, (0, 2, 3, 1)).reshape(-1, C)
    d = (jnp.sum(z_flat ** 2, axis=1, keepdims=True)
         + jnp.sum(embedding ** 2, axis=1)
         - 2.0 * z_flat @ embedding.T)
    ref_idx = jnp.argmin(d, axis=1).astype(jnp.int32)
    ref_q = jnp.transpose(embedding[ref_idx].reshape(B, H, W, C), (0, 3, 1, 2))
    ref_loss = jnp.mean((ref_q - z) ** 2)

    assert jnp.array_equal(idx.reshape(-1), ref_idx)
    assert jnp.allclose(quantized, ref_q, atol=1e-6)
    assert jnp.allclose(codebook_loss, ref_loss, rtol=1e-5, atol=1e-6)
    assert jnp.allclose(commitment_loss, ref_loss, rtol=1e-5, atol=1e-6)


if __name__ == "__main__":
    key = jax.random.PRNGKey(0)
    B, C, H, W = 2, 4, 16, 16
    num_embeddings, embedding_dim, beta = 128, C, 0.25   # beta unused in forward

    k_z, k_e, k_z2, k_z3 = jax.random.split(key, 4)
    z = jax.random.normal(k_z, (B, C, H, W), dtype=jnp.float32)
    # nn.Embedding weight, init uniform(-1/K, 1/K) as in the module's __init__.
    embedding = jax.random.uniform(
        k_e, (num_embeddings, embedding_dim), dtype=jnp.float32,
        minval=-1.0 / num_embeddings, maxval=1.0 / num_embeddings)

    outs = jax.block_until_ready(vector_quantizer_forward(z, embedding))
    _check(z, embedding, *outs)

    # Ragged spatial extent smaller than the tile: HW=100 -> one full-extent block.
    z2 = jax.random.normal(k_z2, (2, C, 10, 10), dtype=jnp.float32)
    outs2 = jax.block_until_ready(vector_quantizer_forward(z2, embedding, tm=128))
    _check(z2, embedding, *outs2)

    # Ragged spatial extent larger than the tile: HW=196, tm=128 -> partial
    # trailing block (garbage columns masked in-kernel / dropped on writeback).
    z3 = jax.random.normal(k_z3, (1, C, 14, 14), dtype=jnp.float32)
    outs3 = jax.block_until_ready(vector_quantizer_forward(z3, embedding, tm=128))
    _check(z3, embedding, *outs3)

    print("KERNEL_OK")
</pallas_src>

<mosaic_0001>
module attributes {stable_mosaic.version = 11 : i64} {
  func.func @_vq_kernel(%arg0: i32, %arg1: i32, %arg2: memref<1x4x256xf32, #tpu.memory_space<vmem>>, %arg3: memref<128x4xf32, #tpu.memory_space<vmem>>, %arg4: memref<4x128xf32, #tpu.memory_space<vmem>>, %arg5: memref<128x1xf32, #tpu.memory_space<vmem>>, %arg6: memref<1x4x256xf32, #tpu.memory_space<vmem>>, %arg7: memref<1x1x256xi32, #tpu.memory_space<vmem>>, %arg8: memref<1x1x1x1xf32, #tpu.memory_space<vmem>>) attributes {dimension_semantics = [#tpu.dimension_semantics<parallel>, #tpu.dimension_semantics<parallel>], iteration_bounds = array<i64: 2, 1>, scalar_prefetch = 0 : i64, scratch_operands = 0 : i64, tpu.core_type = #tpu.core_type<tc>, window_params = [{transform_indices = @transform_0, window_bounds = array<i64: 1, 4, 256>}, {pipeline_mode = #tpu.pipeline_mode<synchronous>, transform_indices = @transform_1, window_bounds = array<i64: 128, 4>}, {pipeline_mode = #tpu.pipeline_mode<synchronous>, transform_indices = @transform_2, window_bounds = array<i64: 4, 128>}, {pipeline_mode = #tpu.pipeline_mode<synchronous>, transform_indices = @transform_3, window_bounds = array<i64: 128, 1>}, {transform_indices = @transform_4, window_bounds = array<i64: 1, 4, 256>}, {transform_indices = @transform_5, window_bounds = array<i64: 1, 1, 256>}, {transform_indices = @transform_6, window_bounds = array<i64: 1, 1, 1, 1>}]} {
    %c0 = arith.constant 0 : index
    %c0_0 = arith.constant 0 : index
    %c0_1 = arith.constant 0 : index
    %0 = vector.load %arg2[%c0, %c0_0, %c0_1] : memref<1x4x256xf32, #tpu.memory_space<vmem>>, vector<1x4x256xf32>
    %1 = vector.shape_cast %0 : vector<1x4x256xf32> to vector<4x256xf32>
    %c0_2 = arith.constant 0 : index
    %c0_3 = arith.constant 0 : index
    %2 = vector.load %arg3[%c0_2, %c0_3] : memref<128x4xf32, #tpu.memory_space<vmem>>, vector<128x4xf32>
    %c0_4 = arith.constant 0 : index
    %c0_5 = arith.constant 0 : index
    %3 = vector.load %arg4[%c0_4, %c0_5] : memref<4x128xf32, #tpu.memory_space<vmem>>, vector<4x128xf32>
    %c0_6 = arith.constant 0 : index
    %c0_7 = arith.constant 0 : index
    %4 = vector.load %arg5[%c0_6, %c0_7] : memref<128x1xf32, #tpu.memory_space<vmem>>, vector<128x1xf32>
    %cst = arith.constant dense<0.000000e+00> : vector<128x256xf32>
    %5 = tpu.matmul %2, %1, %cst {dimension_numbers = #tpu.dot_dimension_numbers<[1], [0], [0], [1], [0, 0, 1, 1], [], []>} : vector<128x4xf32>, vector<4x256xf32>, vector<128x256xf32> -> vector<128x256xf32>
    %6 = vector.broadcast %4 : vector<128x1xf32> to vector<128x256xf32>
    %7 = arith.addf %6, %5 : vector<128x256xf32>
    %8 = tpu.iota {dimensions = array<i32: 0>} : vector<128x256xi32>
    %cst_8 = arith.constant dense<0x7F800000> : vector<256xf32>
    %9 = vector.multi_reduction <minimumf>, %7, %cst_8 [0] : vector<128x256xf32> to vector<256xf32>
    %10 = vector.shape_cast %9 : vector<256xf32> to vector<1x256xf32>
    %11 = vector.broadcast %10 : vector<1x256xf32> to vector<128x256xf32>
    %12 = arith.cmpf oeq, %7, %11 : vector<128x256xf32>
    %c128_i32 = arith.constant 128 : i32
    %13 = vector.broadcast %c128_i32 : i32 to vector<128x256xi32>
    %14 = arith.select %12, %8, %13 : vector<128x256xi1>, vector<128x256xi32>
    %cst_9 = arith.constant dense<2147483647> : vector<256xi32>
    %15 = vector.multi_reduction <minsi>, %14, %cst_9 [0] : vector<128x256xi32> to vector<256xi32>
    %16 = vector.shape_cast %15 : vector<256xi32> to vector<1x256xi32>
    %c0_10 = arith.constant 0 : index
    %c0_11 = arith.constant 0 : index
    %c0_12 = arith.constant 0 : index
    %17 = vector.load %arg7[%c0_10, %c0_11, %c0_12] : memref<1x1x256xi32, #tpu.memory_space<vmem>>, vector<1x1x256xi32>
    %18 = vector.shape_cast %17 : vector<1x1x256xi32> to vector<1x256xi32>
    %19 = vector.shape_cast %16 : vector<1x256xi32> to vector<1x1x256xi32>
    tpu.vector_store %arg7[%c0_10, %c0_11, %c0_12], %19 {strides = array<i32>} : memref<1x1x256xi32, #tpu.memory_space<vmem>>, vector<1x1x256xi32>,
    %20 = vector.broadcast %16 : vector<1x256xi32> to vector<128x256xi32>
    %21 = arith.cmpi eq, %8, %20 : vector<128x256xi32>
    %22 = arith.extui %21 : vector<128x256xi1> to vector<128x256xi32>
    %23 = arith.sitofp %22 : vector<128x256xi32> to vector<128x256xf32>
    %cst_13 = arith.constant dense<0.000000e+00> : vector<4x256xf32>
    %24 = tpu.matmul %3, %23, %cst_13 {dimension_numbers = #tpu.dot_dimension_numbers<[1], [0], [0], [1], [0, 0, 1, 1], [], []>} : vector<4x128xf32>, vector<128x256xf32>, vector<4x256xf32> -> vector<4x256xf32>
    %c0_14 = arith.constant 0 : index
    %c0_15 = arith.constant 0 : index
    %c0_16 = arith.constant 0 : index
    %25 = vector.load %arg6[%c0_14, %c0_15, %c0_16] : memref<1x4x256xf32, #tpu.memory_space<vmem>>, vector<1x4x256xf32>
    %26 = vector.shape_cast %25 : vector<1x4x256xf32> to vector<4x256xf32>
    %27 = vector.shape_cast %24 : vector<4x256xf32> to vector<1x4x256xf32>
    tpu.vector_store %arg6[%c0_14, %c0_15, %c0_16], %27 {strides = array<i32>} : memref<1x4x256xf32, #tpu.memory_space<vmem>>, vector<1x4x256xf32>,
    %28 = arith.subf %24, %1 : vector<4x256xf32>
    %c256_i32 = arith.constant 256 : i32
    %29 = arith.muli %c256_i32, %arg1 : i32
    %30 = tpu.iota {dimensions = array<i32: 1>} : vector<1x256xi32>
    %31 = vector.broadcast %29 : i32 to vector<1x256xi32>
    %32 = arith.addi %31, %30 : vector<1x256xi32>
    %33 = arith.mulf %28, %28 : vector<4x256xf32>
    %cst_17 = arith.constant dense<0.000000e+00> : vector<256xf32>
    %34 = vector.multi_reduction <add>, %33, %cst_17 [0] : vector<4x256xf32> to vector<256xf32>
    %35 = vector.shape_cast %34 : vector<256xf32> to vector<1x256xf32>
    %c256_i32_18 = arith.constant 256 : i32
    %36 = vector.broadcast %c256_i32_18 : i32 to vector<1x256xi32>
    %37 = arith.cmpi slt, %32, %36 : vector<1x256xi32>
    %cst_19 = arith.constant 0.000000e+00 : f32
    %38 = vector.broadcast %cst_19 : f32 to vector<1x256xf32>
    %39 = arith.select %37, %35, %38 : vector<1x256xi1>, vector<1x256xf32>
    %cst_20 = arith.constant dense<0.000000e+00> : vector<1xf32>
    %40 = vector.multi_reduction <add>, %39, %cst_20 [1] : vector<1x256xf32> to vector<1xf32>
    %41 = vector.shape_cast %40 : vector<1xf32> to vector<1x1xf32>
    %42 = vector.shape_cast %41 : vector<1x1xf32> to vector<1x1x1x1xf32>
    %c0_21 = arith.constant 0 : index
    %c0_22 = arith.constant 0 : index
    %c0_23 = arith.constant 0 : index
    %c0_24 = arith.constant 0 : index
    %43 = vector.load %arg8[%c0_21, %c0_22, %c0_23, %c0_24] : memref<1x1x1x1xf32, #tpu.memory_space<vmem>>, vector<1x1x1x1xf32>
    tpu.vector_store %arg8[%c0_21, %c0_22, %c0_23, %c0_24], %42 {strides = array<i32>} : memref<1x1x1x1xf32, #tpu.memory_space<vmem>>, vector<1x1x1x1xf32>,
    return
  }
  func.func @transform_0(%arg0: i32, %arg1: i32) -> (i32, i32, i32) {
    %c0_i32 = arith.constant 0 : i32
    %c0_i32_0 = arith.constant 0 : i32
    return %arg0, %c0_i32, %arg1 : i32, i32, i32
  }
  func.func @transform_1(%arg0: i32, %arg1: i32) -> (i32, i32) {
    %c0_i32 = arith.constant 0 : i32
    %c0_i32_0 = arith.constant 0 : i32
    %c0_i32_1 = arith.constant 0 : i32
    return %c0_i32, %c0_i32_0 : i32, i32
  }
  func.func @transform_2(%arg0: i32, %arg1: i32) -> (i32, i32) {
    %c0_i32 = arith.constant 0 : i32
    %c0_i32_0 = arith.constant 0 : i32
    %c0_i32_1 = arith.constant 0 : i32
    return %c0_i32, %c0_i32_0 : i32, i32
  }
  func.func @transform_3(%arg0: i32, %arg1: i32) -> (i32, i32) {
    %c0_i32 = arith.constant 0 : i32
    %c0_i32_0 = arith.constant 0 : i32
    %c0_i32_1 = arith.constant 0 : i32
    return %c0_i32, %c0_i32_0 : i32, i32
  }
  func.func @transform_4(%arg0: i32, %arg1: i32) -> (i32, i32, i32) {
    %c0_i32 = arith.constant 0 : i32
    %c0_i32_0 = arith.constant 0 : i32
    return %arg0, %c0_i32, %arg1 : i32, i32, i32
  }
  func.func @transform_5(%arg0: i32, %arg1: i32) -> (i32, i32, i32) {
    %c0_i32 = arith.constant 0 : i32
    %c0_i32_0 = arith.constant 0 : i32
    return %arg0, %c0_i32, %arg1 : i32, i32, i32
  }
  func.func @transform_6(%arg0: i32, %arg1: i32) -> (i32, i32, i32, i32) {
    %c0_i32 = arith.constant 0 : i32
    %c0_i32_0 = arith.constant 0 : i32
    %c0_i32_1 = arith.constant 0 : i32
    return %arg0, %arg1, %c0_i32, %c0_i32_0 : i32, i32, i32, i32
  }
}

</mosaic_0001>

<llo_original>
// kernel: tpu_custom_call.1
$region0: #{tpu_custom_call.1}
  #allocation0 [shape = 'u32[]', space=smem, size = 0x4, offset = 0x4, fixed_abs, tag = 'smem constant byte address 0x4 - core index']
  #allocation1 [shape = 'u32[144,128]{1,0:T(1,128)}', space=vmem, size = 0x12000, scoped, tag = 'internal scratch']
  %s0 = inlined_call_operand.vmem [shape: f32[2,4,256], index: 0, kind: input, shape index: {}]
  %s1 = inlined_call_operand.vmem [shape: f32[128,4], index: 1, kind: input, shape index: {}]
  %s2 = inlined_call_operand.vmem [shape: f32[4,128], index: 2, kind: input, shape index: {}]
  %s3 = inlined_call_operand.vmem [shape: f32[128,1], index: 3, kind: input, shape index: {}]
  %s4 = inlined_call_operand.hbm [shape: f32[2,4,256], index: 4, kind: output, shape index: {0}]
  %s5 = inlined_call_operand.hbm [shape: s32[2,1,256], index: 5, kind: output, shape index: {1}]
  %s6 = inlined_call_operand.vmem [shape: f32[2,1,1,1], index: 6, kind: output, shape index: {2}]
  %7 = xla_tuple %s4, %s5, %s6
  %s8 = sld [smem:[#allocation0]]
  $region65: #{tpu_custom_call.1} parent=0
    _
  %s10 = ssub.s32 1, %s8
  %s11 = scalar_select 0, %s10, %s8
  $region1: #{tpu_custom_call.1} parent=0
    #allocation2 [shape = 'u8[8192]{0}', space=vmem, size = 0x2000, scoped, tag = 'output window, operand 0']
    #allocation3 [shape = 's32[2]{0}', space=sflag, size = 0x8, scoped, tag = 'scoped memory for tpu_custom_call.1']
    #allocation4 [shape = 'u8[2048]{0}', space=vmem, size = 0x800, scoped, tag = 'output window, operand 1']
    #allocation5 [shape = 's32[2]{0}', space=sflag, size = 0x8, scoped, tag = 'scoped memory for tpu_custom_call.1']
    %12 = vsyncpa [#allocation3], 0
    %s13 = scalar_lea.sflag [#allocation3], 1
    %14 = vsyncpa %s13, 0
    %15 = vsyncpa [#allocation5], 0
    %s16 = scalar_lea.sflag [#allocation5], 1
    %17 = vsyncpa %s16, 0
    loop: start=0, step=1, limit=4
    $region2: #{tpu_custom_call.1} parent=1 // loop_pre_header
      _
    $region3: #{tpu_custom_call.1} parent=1 // loop_header
      %s19 = sphi 0, %s23
      %p20 = scmp.ge.s32.totalorder %s19, 4
      %s26 = sphi 0, %s38
      %s27 = sphi 0, %s34
      %s28 = sphi 0, %s26
      %s29 = sphi 0, %s27
      %s30 = sphi 0, %s28
      %s31 = sphi 0, %s29
      %s43 = sphi 0, %s45
      %s46 = sphi 0, %s43
      %s47 = sphi 0, %s46
      %s63 = sphi 0, %s47
      %s67 = sphi 0, %s67
      %s69 = sphi 0, %s67
      %s70 = sphi 0, %s69
      %s84 = sphi 0, %s70
      %s88 = sphi 0, %s88
      %s90 = sphi 0, %s88
      %s91 = sphi 0, %s90
      %s105 = sphi 0, %s91
      %s109 = sphi 0, %s109
      %s111 = sphi 0, %s109
      %s112 = sphi 0, %s111
      %s126 = sphi 0, %s112
      %s134 = sphi 0, %s136
      %s137 = sphi 0, %s134
      %s138 = sphi 0, %s137
      %s154 = sphi 0, %s138
      %s162 = sphi 0, %s164
      %s165 = sphi 0, %s162
      %s166 = sphi 0, %s165
      %s182 = sphi 0, %s166
      %s190 = sphi 0, %s192
      %s193 = sphi 0, %s190
      %s194 = sphi 0, %s193
      %s210 = sphi 0, %s194
    $region4: #{tpu_custom_call.1} parent=1 // loop_header_branch
      %22 = sbr.rel (%p20) target = $region8
    $region5: #{tpu_custom_call.1} parent=1 // loop_body
      %s24 = ssub.s32 %s19, 1
      %s25 = ssub.s32 %s19, 2
      %s32 = sadd.s32 1, %s27
      %p33 = scmp.ge.s32.totalorder %s32, 1
      %s34 = scalar_select %p33, 0, %s32
      %s35 = sadd.s32 1, %s26
      %s36 = scalar_select %p33, %s35, %s26
      %p37 = scmp.ge.s32.totalorder %s36, 2
      %s38 = scalar_select %p37, 0, %s36
      %s39 = ssub.s32 %s26, %s38
      %s40 = ssub.s32 %s27, %s34
      %s41 = sor.u32 %s39, %s40
      %p42 = scmp.eq.s32.totalorder %s41, 0
      %s44 = sadd.s32 %s43, 1
      %s45 = scalar_select %p42, %s43, %s44
      %p48 = pneg %p42
      %p49 = scmp.eq.s32.totalorder %s19, 1
      %p50 = por %p48, %p49
      %p51 = scmp.ne.s32.totalorder %s43, %s46
      %p52 = scmp.eq.s32.totalorder %s19, 0
      %p53 = por %p51, %p52
      %p54 = scmp.ne.s32.totalorder %s43, %s46
      %p55 = scmp.eq.s32.totalorder %s24, 1
      %p56 = por %p54, %p55
      %p57 = scmp.ne.s32.totalorder %s46, %s47
      %p58 = scmp.eq.s32.totalorder %s24, 0
      %p59 = por %p57, %p58
      %p60 = scmp.ne.s32.totalorder %s46, %s47
      %p61 = scmp.eq.s32.totalorder %s25, 1
      %p62 = por %p60, %p61
      %p64 = scmp.ne.s32.totalorder %s47, %s63
      %p65 = scmp.eq.s32.totalorder %s25, 0
      %p66 = por %p64, %p65
      %s68 = sadd.s32 %s67, 1
      %p71 = scmp.eq.s32.totalorder %s19, 1
      %p72 = scmp.ne.s32.totalorder %s67, %s69
      %p73 = scmp.eq.s32.totalorder %s19, 0
      %p74 = por %p72, %p73
      %p75 = scmp.ne.s32.totalorder %s67, %s69
      %p76 = scmp.eq.s32.totalorder %s24, 1
      %p77 = por %p75, %p76
      %p78 = scmp.ne.s32.totalorder %s69, %s70
      %p79 = scmp.eq.s32.totalorder %s24, 0
      %p80 = por %p78, %p79
      %p81 = scmp.ne.s32.totalorder %s69, %s70
      %p82 = scmp.eq.s32.totalorder %s25, 1
      %p83 = por %p81, %p82
      %p85 = scmp.ne.s32.totalorder %s70, %s84
      %p86 = scmp.eq.s32.totalorder %s25, 0
      %p87 = por %p85, %p86
      %s89 = sadd.s32 %s88, 1
      %p92 = scmp.eq.s32.totalorder %s19, 1
      %p93 = scmp.ne.s32.totalorder %s88, %s90
      %p94 = scmp.eq.s32.totalorder %s19, 0
      %p95 = por %p93, %p94
      %p96 = scmp.ne.s32.totalorder %s88, %s90
      %p97 = scmp.eq.s32.totalorder %s24, 1
      %p98 = por %p96, %p97
      %p99 = scmp.ne.s32.totalorder %s90, %s91
      %p100 = scmp.eq.s32.totalorder %s24, 0
      %p101 = por %p99, %p100
      %p102 = scmp.ne.s32.totalorder %s90, %s91
      %p103 = scmp.eq.s32.totalorder %s25, 1
      %p104 = por %p102, %p103
      %p106 = scmp.ne.s32.totalorder %s91, %s105
      %p107 = scmp.eq.s32.totalorder %s25, 0
      %p108 = por %p106, %p107
      %s110 = sadd.s32 %s109, 1
      %p113 = scmp.eq.s32.totalorder %s19, 1
      %p114 = scmp.ne.s32.totalorder %s109, %s111
      %p115 = scmp.eq.s32.totalorder %s19, 0
      %p116 = por %p114, %p115
      %p117 = scmp.ne.s32.totalorder %s109, %s111
      %p118 = scmp.eq.s32.totalorder %s24, 1
      %p119 = por %p117, %p118
      %p120 = scmp.ne.s32.totalorder %s111, %s112
      %p121 = scmp.eq.s32.totalorder %s24, 0
      %p122 = por %p120, %p121
      %p123 = scmp.ne.s32.totalorder %s111, %s112
      %p124 = scmp.eq.s32.totalorder %s25, 1
      %p125 = por %p123, %p124
      %p127 = scmp.ne.s32.totalorder %s112, %s126
      %p128 = scmp.eq.s32.totalorder %s25, 0
      %p129 = por %p127, %p128
      %s130 = ssub.s32 %s26, %s38
      %s131 = ssub.s32 %s27, %s34
      %s132 = sor.u32 %s130, %s131
      %p133 = scmp.eq.s32.totalorder %s132, 0
      %s135 = sadd.s32 %s134, 1
      %s136 = scalar_select %p133, %s134, %s135
      %p139 = pneg %p133
      %p140 = scmp.eq.s32.totalorder %s19, 1
      %p141 = por %p139, %p140
      %p142 = scmp.ne.s32.totalorder %s134, %s137
      %p143 = scmp.eq.s32.totalorder %s19, 0
      %p144 = por %p142, %p143
      %p145 = scmp.ne.s32.totalorder %s134, %s137
      %p146 = scmp.eq.s32.totalorder %s24, 1
      %p147 = por %p145, %p146
      %p148 = scmp.ne.s32.totalorder %s137, %s138
      %p149 = scmp.eq.s32.totalorder %s24, 0
      %p150 = por %p148, %p149
      %p151 = scmp.ne.s32.totalorder %s137, %s138
      %p152 = scmp.eq.s32.totalorder %s25, 1
      %p153 = por %p151, %p152
      %p155 = scmp.ne.s32.totalorder %s138, %s154
      %p156 = scmp.eq.s32.totalorder %s25, 0
      %p157 = por %p155, %p156
      %s158 = ssub.s32 %s26, %s38
      %s159 = ssub.s32 %s27, %s34
      %s160 = sor.u32 %s158, %s159
      %p161 = scmp.eq.s32.totalorder %s160, 0
      %s163 = sadd.s32 %s162, 1
      %s164 = scalar_select %p161, %s162, %s163
      %p167 = pneg %p161
      %p168 = scmp.eq.s32.totalorder %s19, 1
      %p169 = por %p167, %p168
      %p170 = scmp.ne.s32.totalorder %s162, %s165
      %p171 = scmp.eq.s32.totalorder %s19, 0
      %p172 = por %p170, %p171
      %p173 = scmp.ne.s32.totalorder %s162, %s165
      %p174 = scmp.eq.s32.totalorder %s24, 1
      %p175 = por %p173, %p174
      %p176 = scmp.ne.s32.totalorder %s165, %s166
      %p177 = scmp.eq.s32.totalorder %s24, 0
      %p178 = por %p176, %p177
      %p179 = scmp.ne.s32.totalorder %s165, %s166
      %p180 = scmp.eq.s32.totalorder %s25, 1
      %p181 = por %p179, %p180
      %p183 = scmp.ne.s32.totalorder %s166, %s182
      %p184 = scmp.eq.s32.totalorder %s25, 0
      %p185 = por %p183, %p184
      %s186 = ssub.s32 %s26, %s38
      %s187 = ssub.s32 %s27, %s34
      %s188 = sor.u32 %s186, %s187
      %p189 = scmp.eq.s32.totalorder %s188, 0
      %s191 = sadd.s32 %s190, 1
      %s192 = scalar_select %p189, %s190, %s191
      %p195 = pneg %p189
      %p196 = scmp.eq.s32.totalorder %s19, 1
      %p197 = por %p195, %p196
      %p198 = scmp.ne.s32.totalorder %s190, %s193
      %p199 = scmp.eq.s32.totalorder %s19, 0
      %p200 = por %p198, %p199
      %p201 = scmp.ne.s32.totalorder %s190, %s193
      %p202 = scmp.eq.s32.totalorder %s24, 1
      %p203 = por %p201, %p202
      %p204 = scmp.ne.s32.totalorder %s193, %s194
      %p205 = scmp.eq.s32.totalorder %s24, 0
      %p206 = por %p204, %p205
      %p207 = scmp.ne.s32.totalorder %s193, %s194
      %p208 = scmp.eq.s32.totalorder %s25, 1
      %p209 = por %p207, %p208
      %p211 = scmp.ne.s32.totalorder %s194, %s210
      %p212 = scmp.eq.s32.totalorder %s25, 0
      %p213 = por %p211, %p212
      %p214 = scmp.le.s32.totalorder 1, %s19
      %p215 = scmp.lt.s32.totalorder %s19, 3
      %p216 = pnand %p214, %p215
      %p217 = pneg %p216
      // Predicated region
      $region9: #{tpu_custom_call.1} parent=5 // pred_check
        _
      $region10: #{tpu_custom_call.1} parent=5 // pred_check_branch
        %219 = sbr.rel (%p216) target = $region12
      $region11: #{tpu_custom_call.1} parent=5 // pred_region
        %s220 = ssub.s32 %s19, 1
        // Predicated region
        $region13: #{tpu_custom_call.1} parent=11 // pred_check
          %p221 = pneg %p80
        $region14: #{tpu_custom_call.1} parent=11 // pred_check_branch
          %223 = sbr.rel (%p221) target = $region16
        $region15: #{tpu_custom_call.1} parent=11 // pred_region
          _
        $region16: #{tpu_custom_call.1} parent=11 // pred_fallthru
          _
        // Predicated region
        $region17: #{tpu_custom_call.1} parent=11 // pred_check
          %p224 = pneg %p101
        $region18: #{tpu_custom_call.1} parent=11 // pred_check_branch
          %226 = sbr.rel (%p224) target = $region20
        $region19: #{tpu_custom_call.1} parent=11 // pred_region
          _
        $region20: #{tpu_custom_call.1} parent=11 // pred_fallthru
          _
        // Predicated region
        $region21: #{tpu_custom_call.1} parent=11 // pred_check
          %p227 = pneg %p122
        $region22: #{tpu_custom_call.1} parent=11 // pred_check_branch
          %229 = sbr.rel (%p227) target = $region24
        $region23: #{tpu_custom_call.1} parent=11 // pred_region
          _
        $region24: #{tpu_custom_call.1} parent=11 // pred_fallthru
          _
      $region12: #{tpu_custom_call.1} parent=5 // pred_fallthru
        _
      %p230 = scmp.lt.s32.totalorder %s19, 2
      // Predicated region
      $region25: #{tpu_custom_call.1} parent=5 // pred_check
        %p231 = pneg %p230
      $region26: #{tpu_custom_call.1} parent=5 // pred_check_branch
        %233 = sbr.rel (%p231) target = $region28
      $region27: #{tpu_custom_call.1} parent=5 // pred_region
        // Predicated region
        $region29: #{tpu_custom_call.1} parent=27 // pred_check
          %p234 = pneg %p53
        $region30: #{tpu_custom_call.1} parent=27 // pred_check_branch
          %236 = sbr.rel (%p234) target = $region32
        $region31: #{tpu_custom_call.1} parent=27 // pred_region
          %s237 = smul.u32 2, %s27
          %p238 = scmp.lt.s32.totalorder %s26, 1
          %s239 = scalar_select %p238, %s26, 1
          %p240 = scmp.lt.s32.totalorder %s237, 1
          %s241 = scalar_select %p240, %s237, 1
          %s242 = smul.addr %s239, 2
          %s243 = sadd.s32 %s241, %s242
          %s244 = smul.addr %s243, 4
          %s245 = scalar_lea.vmem %s0, %s244
          %s246 = smul.u32 2, %s27
        $region32: #{tpu_custom_call.1} parent=27 // pred_fallthru
          _
      $region28: #{tpu_custom_call.1} parent=5 // pred_fallthru
        _
      %p247 = scmp.le.s32.totalorder 1, %s19
      %p248 = scmp.lt.s32.totalorder %s19, 3
      %p249 = pnand %p247, %p248
      %p250 = pneg %p249
      // Predicated region
      $region33: #{tpu_custom_call.1} parent=5 // pred_check
        _
      $region34: #{tpu_custom_call.1} parent=5 // pred_check_branch
        %252 = sbr.rel (%p249) target = $region36
      $region35: #{tpu_custom_call.1} parent=5 // pred_region
        %s253 = ssub.s32 %s19, 1
        %s254 = smul.u32 2, %s29
        %p255 = scmp.lt.s32.totalorder %s28, 1
        %s256 = scalar_select %p255, %s28, 1
        %p257 = scmp.lt.s32.totalorder %s254, 1
        %s258 = scalar_select %p257, %s254, 1
        %s259 = smul.addr %s256, 2
        %s260 = sadd.s32 %s258, %s259
        %s261 = smul.addr %s260, 4
        %s262 = scalar_lea.vmem %s0, %s261
        %p263 = pneg %p59
        %p264 = pneg %p56
        %p265 = pneg %p80
        %p266 = pneg %p77
        %p267 = pneg %p101
        %p268 = pneg %p98
        %p269 = pneg %p122
        %p270 = pneg %p119
        %p271 = pneg %p150
        %p272 = pneg %p147
        %s273 = sand.u32 %s137, 1
        %s274 = scalar_lea.sflag [#allocation3], %s273
        %s275 = sand.u32 %s137, 1
        %s276 = smul.addr %s275, 8
        %s277 = scalar_lea.vmem [#allocation2], %s276
        %p278 = pneg %p178
        %p279 = pneg %p175
        %s280 = sand.u32 %s165, 1
        %s281 = scalar_lea.sflag [#allocation5], %s280
        %s282 = sand.u32 %s165, 1
        %s283 = smul.addr %s282, 2
        %s284 = scalar_lea.vmem [#allocation4], %s283
        %p285 = pneg %p206
        %p286 = pneg %p203
        %p287 = scmp.lt.s32.totalorder %s28, 1
        %s288 = scalar_select %p287, %s28, 1
        %p289 = scmp.lt.s32.totalorder %s29, 0
        %s290 = scalar_select %p289, %s29, 0
        %s291 = sadd.s32 %s290, %s288
        %s292 = scalar_lea.vmem %s6, %s291
        %s293 = smul.u32 2, %s29
        %p294 = scmp.lt.s32.totalorder %s28, 1
        %s295 = scalar_select %p294, %s28, 1
        %p296 = scmp.lt.s32.totalorder %s293, 1
        %s297 = scalar_select %p296, %s293, 1
        %s298 = smul.addr %s295, 2
        %s299 = sadd.s32 %s297, %s298
        %s300 = smul.addr %s299, 4
        %s301 = scalar_lea.vmem %s0, %s300
        %s302 = smul.u32 2, %s29
        %s303 = smul.u32 2, %s29
        %s304 = smul.u32 2, %s29
        %p305 = scmp.lt.s32.totalorder %s28, 1
        %s306 = scalar_select %p305, %s28, 1
        %p307 = scmp.lt.s32.totalorder %s29, 0
        %s308 = scalar_select %p307, %s29, 0
        %s309 = sadd.s32 %s308, %s306
        %s310 = scalar_lea.vmem %s6, %s309
        %v311 = vld [vmem:[%s301] sm:$0xff]
        %v312 = vld [vmem:[%s1] sm:$0xff]
        %v313 = vld [vmem:[%s1 + $0x8] sm:$0xff]
        %v314 = vld [vmem:[%s1 + $0x10] sm:$0xff]
        %v315 = vld [vmem:[%s1 + $0x18] sm:$0xff]
        %v316 = vld [vmem:[%s1 + $0x20] sm:$0xff]
        %v317 = vld [vmem:[%s1 + $0x28] sm:$0xff]
        %v318 = vld [vmem:[%s1 + $0x30] sm:$0xff]
        %v319 = vld [vmem:[%s1 + $0x38] sm:$0xff]
        %v320 = vld [vmem:[%s1 + $0x40] sm:$0xff]
        %v321 = vld [vmem:[%s1 + $0x48] sm:$0xff]
        %v322 = vld [vmem:[%s1 + $0x50] sm:$0xff]
        %v323 = vld [vmem:[%s1 + $0x58] sm:$0xff]
        %v324 = vld [vmem:[%s1 + $0x60] sm:$0xff]
        %v325 = vld [vmem:[%s1 + $0x68] sm:$0xff]
        %v326 = vld [vmem:[%s1 + $0x70] sm:$0xff]
        %v327 = vld [vmem:[%s1 + $0x78] sm:$0xff]
        %v328 = vld [vmem:[%s2] sm:$0xf]
        %v329 = vld [vmem:[%s3] sm:$0xff]
        %v330 = vld [vmem:[%s3 + $0x8] sm:$0xff]
        %v331 = vld [vmem:[%s3 + $0x10] sm:$0xff]
        %v332 = vld [vmem:[%s3 + $0x18] sm:$0xff]
        %v333 = vld [vmem:[%s3 + $0x20] sm:$0xff]
        %v334 = vld [vmem:[%s3 + $0x28] sm:$0xff]
        %v335 = vld [vmem:[%s3 + $0x30] sm:$0xff]
        %v336 = vld [vmem:[%s3 + $0x38] sm:$0xff]
        %v337 = vld [vmem:[%s3 + $0x40] sm:$0xff]
        %v338 = vld [vmem:[%s3 + $0x48] sm:$0xff]
        %v339 = vld [vmem:[%s3 + $0x50] sm:$0xff]
        %v340 = vld [vmem:[%s3 + $0x58] sm:$0xff]
        %v341 = vld [vmem:[%s3 + $0x60] sm:$0xff]
        %v342 = vld [vmem:[%s3 + $0x68] sm:$0xff]
        %v343 = vld [vmem:[%s3 + $0x70] sm:$0xff]
        %v344 = vld [vmem:[%s3 + $0x78] sm:$0xff]
        %v346 = vcombine.high %v311, %v311
        %vm347 = vcmask 31744
        %v349 = vsel %vm347, %v312, 0
        %v352 = vsel %vm347, %v313, 0
        %v355 = vsel %vm347, %v314, 0
        %v358 = vsel %vm347, %v315, 0
        %v361 = vsel %vm347, %v316, 0
        %v364 = vsel %vm347, %v317, 0
        %v367 = vsel %vm347, %v318, 0
        %v370 = vsel %vm347, %v319, 0
        %v373 = vsel %vm347, %v320, 0
        %v376 = vsel %vm347, %v321, 0
        %v379 = vsel %vm347, %v322, 0
        %v382 = vsel %vm347, %v323, 0
        %v385 = vsel %vm347, %v324, 0
        %v388 = vsel %vm347, %v325, 0
        %v391 = vsel %vm347, %v326, 0
        %v394 = vsel %vm347, %v327, 0
        %vm396 = vcmask 1043456
        %v397 = vsel %vm396, %v311, 0
        %v399 = vsel %vm396, %v346, 0
        %401 = vmatprep.subr.mxu0 %v399
        %402 = vmatpush1.msra.mxu0 %v397
        %403 = vmatprep.subr.mxu0 0.0
        %404 = vmatpush1.msra.mxu0 0.0
        %405 = vmatprep.subr.mxu0 0.0
        %406 = vmatpush1.msra.mxu0 0.0
        %407 = vmatprep.subr.mxu0 0.0
        %408 = vmatpush1.msra.mxu0 0.0
        %409 = vmatprep.subr.mxu0 0.0
        %410 = vmatpush1.msra.mxu0 0.0
        %411 = vmatprep.subr.mxu0 0.0
        %412 = vmatpush1.msra.mxu0 0.0
        %413 = vmatprep.subr.mxu0 0.0
        %414 = vmatpush1.msra.mxu0 0.0
        %415 = vmatprep.subr.mxu0 0.0
        %416 = vmatpush1.msra.mxu0 0.0
        %417 = vmatprep.subr.mxu0 0.0
        %418 = vmatpush1.msra.mxu0 0.0
        %419 = vmatprep.subr.mxu0 0.0
        %420 = vmatpush1.msra.mxu0 0.0
        %421 = vmatprep.subr.mxu0 0.0
        %422 = vmatpush1.msra.mxu0 0.0
        %423 = vmatprep.subr.mxu0 0.0
        %424 = vmatpush1.msra.mxu0 0.0
        %425 = vmatprep.subr.mxu0 0.0
        %426 = vmatpush1.msra.mxu0 0.0
        %427 = vmatprep.subr.mxu0 0.0
        %428 = vmatpush1.msra.mxu0 0.0
        %429 = vmatprep.subr.mxu0 0.0
        %430 = vmatpush1.msra.mxu0 0.0
        %431 = vmatprep.subr.mxu0 0.0
        %432 = vmatpush1.msra.mxu0 0.0
        %433 = vmatprep.subr.mxu0 0.0
        %434 = vmatpush1.msra.mxu0 0.0
        %435 = vmatprep.subr.mxu0 0.0
        %436 = vmatpush1.msra.mxu0 0.0
        %437 = vmatprep.subr.mxu0 0.0
        %438 = vmatpush1.msra.mxu0 0.0
        %439 = vmatprep.subr.mxu0 0.0
        %440 = vmatpush1.msra.mxu0 0.0
        %441 = vmatprep.subr.mxu0 0.0
        %442 = vmatpush1.msra.mxu0 0.0
        %443 = vmatprep.subr.mxu0 0.0
        %444 = vmatpush1.msra.mxu0 0.0
        %445 = vmatprep.subr.mxu0 0.0
        %446 = vmatpush1.msra.mxu0 0.0
        %447 = vmatprep.subr.mxu0 0.0
        %448 = vmatpush1.msra.mxu0 0.0
        %449 = vmatprep.subr.mxu0 0.0
        %450 = vmatpush1.msra.mxu0 0.0
        %451 = vmatprep.subr.mxu0 0.0
        %452 = vmatpush1.msra.mxu0 0.0
        %453 = vmatprep.subr.mxu0 0.0
        %454 = vmatpush1.msra.mxu0 0.0
        %455 = vmatprep.subr.mxu0 0.0
        %456 = vmatpush1.msra.mxu0 0.0
        %457 = vmatprep.subr.mxu0 0.0
        %458 = vmatpush1.msra.mxu0 0.0
        %459 = vmatprep.subr.mxu0 0.0
        %460 = vmatpush1.msra.mxu0 0.0
        %461 = vmatprep.subr.mxu0 0.0
        %462 = vmatpush1.msra.mxu0 0.0
        %463 = vmatprep.subr.mxu0 0.0
        %464 = vmatpush1.msra.mxu0 0.0
        %465 = vmatprep.mubr.f32.mxu0 0.0
        %466 = vmatmul.mubr.f32.gmra.mrb[0].mxu0 %v349
        %v467 = vpop.f32.mrb[0].mxu0
        %v468 = vadd.f32 0.0, %v467
        %v469 = vpop.f32.mrb[0].mxu0
        %v470 = vadd.f32 0.0, %v469
        %471 = vmatprep.mubr.f32.mxu0 0.0
        %472 = vmatmul.mubr.f32.gmra.mrb[0].mxu0 %v352
        %v473 = vpop.f32.mrb[0].mxu0
        %v474 = vadd.f32 0.0, %v473
        %v475 = vpop.f32.mrb[0].mxu0
        %v476 = vadd.f32 0.0, %v475
        %477 = vmatprep.mubr.f32.mxu0 0.0
        %478 = vmatmul.mubr.f32.gmra.mrb[0].mxu0 %v355
        %v479 = vpop.f32.mrb[0].mxu0
        %v480 = vadd.f32 0.0, %v479
        %v481 = vpop.f32.mrb[0].mxu0
        %v482 = vadd.f32 0.0, %v481
        %483 = vmatprep.mubr.f32.mxu0 0.0
        %484 = vmatmul.mubr.f32.gmra.mrb[0].mxu0 %v358
        %v485 = vpop.f32.mrb[0].mxu0
        %v486 = vadd.f32 0.0, %v485
        %v487 = vpop.f32.mrb[0].mxu0
        %v488 = vadd.f32 0.0, %v487
        %489 = vmatprep.mubr.f32.mxu0 0.0
        %490 = vmatmul.mubr.f32.gmra.mrb[0].mxu0 %v361
        %v491 = vpop.f32.mrb[0].mxu0
        %v492 = vadd.f32 0.0, %v491
        %v493 = vpop.f32.mrb[0].mxu0
        %v494 = vadd.f32 0.0, %v493
        %495 = vmatprep.mubr.f32.mxu0 0.0
        %496 = vmatmul.mubr.f32.gmra.mrb[0].mxu0 %v364
        %v497 = vpop.f32.mrb[0].mxu0
        %v498 = vadd.f32 0.0, %v497
        %v499 = vpop.f32.mrb[0].mxu0
        %v500 = vadd.f32 0.0, %v499
        %501 = vmatprep.mubr.f32.mxu0 0.0
        %502 = vmatmul.mubr.f32.gmra.mrb[0].mxu0 %v367
        %v503 = vpop.f32.mrb[0].mxu0
        %v504 = vadd.f32 0.0, %v503
        %v505 = vpop.f32.mrb[0].mxu0
        %v506 = vadd.f32 0.0, %v505
        %507 = vmatprep.mubr.f32.mxu0 0.0
        %508 = vmatmul.mubr.f32.gmra.mrb[0].mxu0 %v370
        %v509 = vpop.f32.mrb[0].mxu0
        %v510 = vadd.f32 0.0, %v509
        %v511 = vpop.f32.mrb[0].mxu0
        %v512 = vadd.f32 0.0, %v511
        %513 = vmatprep.mubr.f32.mxu0 0.0
        %514 = vmatmul.mubr.f32.gmra.mrb[0].mxu0 %v373
        %v515 = vpop.f32.mrb[0].mxu0
        %v516 = vadd.f32 0.0, %v515
        %v517 = vpop.f32.mrb[0].mxu0
        %v518 = vadd.f32 0.0, %v517
        %519 = vmatprep.mubr.f32.mxu0 0.0
        %520 = vmatmul.mubr.f32.gmra.mrb[0].mxu0 %v376
        %v521 = vpop.f32.mrb[0].mxu0
        %v522 = vadd.f32 0.0, %v521
        %v523 = vpop.f32.mrb[0].mxu0
        %v524 = vadd.f32 0.0, %v523
        %525 = vmatprep.mubr.f32.mxu0 0.0
        %526 = vmatmul.mubr.f32.gmra.mrb[0].mxu0 %v379
        %v527 = vpop.f32.mrb[0].mxu0
        %v528 = vadd.f32 0.0, %v527
        %v529 = vpop.f32.mrb[0].mxu0
        %v530 = vadd.f32 0.0, %v529
        %531 = vmatprep.mubr.f32.mxu0 0.0
        %532 = vmatmul.mubr.f32.gmra.mrb[0].mxu0 %v382
        %v533 = vpop.f32.mrb[0].mxu0
        %v534 = vadd.f32 0.0, %v533
        %v535 = vpop.f32.mrb[0].mxu0
        %v536 = vadd.f32 0.0, %v535
        %537 = vmatprep.mubr.f32.mxu0 0.0
        %538 = vmatmul.mubr.f32.gmra.mrb[0].mxu0 %v385
        %v539 = vpop.f32.mrb[0].mxu0
        %v540 = vadd.f32 0.0, %v539
        %v541 = vpop.f32.mrb[0].mxu0
        %v542 = vadd.f32 0.0, %v541
        %543 = vmatprep.mubr.f32.mxu0 0.0
        %544 = vmatmul.mubr.f32.gmra.mrb[0].mxu0 %v388
        %v545 = vpop.f32.mrb[0].mxu0
        %v546 = vadd.f32 0.0, %v545
        %v547 = vpop.f32.mrb[0].mxu0
        %v548 = vadd.f32 0.0, %v547
        %549 = vmatprep.mubr.f32.mxu0 0.0
        %550 = vmatmul.mubr.f32.gmra.mrb[0].mxu0 %v391
        %v551 = vpop.f32.mrb[0].mxu0
        %v552 = vadd.f32 0.0, %v551
        %v553 = vpop.f32.mrb[0].mxu0
        %v554 = vadd.f32 0.0, %v553
        %555 = vmatprep.mubr.f32.mxu0 0.0
        %556 = vmatmul.mubr.f32.gmra.mrb[0].mxu0 %v394
        %v557 = vpop.f32.mrb[0].mxu0
        %v558 = vadd.f32 0.0, %v557
        %v559 = vpop.f32.mrb[0].mxu0
        %v560 = vadd.f32 0.0, %v559
        %561 = vdwg.mxu0
        %563 = vset.pattern.permute.xlu0 0
        %564 = vperm.xlu0 %563, %v329
        %v565 = vpop.permute.xlu0 %564
        %568 = vset.pattern.permute.xlu0 0
        %569 = vperm.xlu0 %568, %v330
        %v570 = vpop.permute.xlu0 %569
        %573 = vset.pattern.permute.xlu0 0
        %574 = vperm.xlu0 %573, %v331
        %v575 = vpop.permute.xlu0 %574
        %578 = vset.pattern.permute.xlu0 0
        %579 = vperm.xlu0 %578, %v332
        %v580 = vpop.permute.xlu0 %579
        %583 = vset.pattern.permute.xlu0 0
        %584 = vperm.xlu0 %583, %v333
        %v585 = vpop.permute.xlu0 %584
        %588 = vset.pattern.permute.xlu0 0
        %589 = vperm.xlu0 %588, %v334
        %v590 = vpop.permute.xlu0 %589
        %593 = vset.pattern.permute.xlu0 0
        %594 = vperm.xlu0 %593, %v335
        %v595 = vpop.permute.xlu0 %594
        %598 = vset.pattern.permute.xlu0 0
        %599 = vperm.xlu0 %598, %v336
        %v600 = vpop.permute.xlu0 %599
        %603 = vset.pattern.permute.xlu0 0
        %604 = vperm.xlu0 %603, %v337
        %v605 = vpop.permute.xlu0 %604
        %608 = vset.pattern.permute.xlu0 0
        %609 = vperm.xlu0 %608, %v338
        %v610 = vpop.permute.xlu0 %609
        %613 = vset.pattern.permute.xlu0 0
        %614 = vperm.xlu0 %613, %v339
        %v615 = vpop.permute.xlu0 %614
        %618 = vset.pattern.permute.xlu0 0
        %619 = vperm.xlu0 %618, %v340
        %v620 = vpop.permute.xlu0 %619
        %623 = vset.pattern.permute.xlu0 0
        %624 = vperm.xlu0 %623, %v341
        %v625 = vpop.permute.xlu0 %624
        %628 = vset.pattern.permute.xlu0 0
        %629 = vperm.xlu0 %628, %v342
        %v630 = vpop.permute.xlu0 %629
        %633 = vset.pattern.permute.xlu0 0
        %634 = vperm.xlu0 %633, %v343
        %v635 = vpop.permute.xlu0 %634
        %638 = vset.pattern.permute.xlu0 0
        %639 = vperm.xlu0 %638, %v344
        %v640 = vpop.permute.xlu0 %639
        %v642 = vadd.f32 %v565, %v468
        %v643 = vadd.f32 %v565, %v470
        %v644 = vadd.f32 %v570, %v474
        %v645 = vadd.f32 %v570, %v476
        %v646 = vadd.f32 %v575, %v480
        %v647 = vadd.f32 %v575, %v482
        %v648 = vadd.f32 %v580, %v486
        %v649 = vadd.f32 %v580, %v488
        %v650 = vadd.f32 %v585, %v492
        %v651 = vadd.f32 %v585, %v494
        %v652 = vadd.f32 %v590, %v498
        %v653 = vadd.f32 %v590, %v500
        %v654 = vadd.f32 %v595, %v504
        %v655 = vadd.f32 %v595, %v506
        %v656 = vadd.f32 %v600, %v510
        %v657 = vadd.f32 %v600, %v512
        %v658 = vadd.f32 %v605, %v516
        %v659 = vadd.f32 %v605, %v518
        %v660 = vadd.f32 %v610, %v522
        %v661 = vadd.f32 %v610, %v524
        %v662 = vadd.f32 %v615, %v528
        %v663 = vadd.f32 %v615, %v530
        %v664 = vadd.f32 %v620, %v534
        %v665 = vadd.f32 %v620, %v536
        %v666 = vadd.f32 %v625, %v540
        %v667 = vadd.f32 %v625, %v542
        %v668 = vadd.f32 %v630, %v546
        %v669 = vadd.f32 %v630, %v548
        %v670 = vadd.f32 %v635, %v552
        %v671 = vadd.f32 %v635, %v554
        %v672 = vadd.f32 %v640, %v558
        %v673 = vadd.f32 %v640, %v560
        %v674 = vlaneseq
        %v675 = vshrl.u32 %v674, 7
        %v676 = vadd.s32 %v675, 8
        %v677 = vadd.s32 %v675, 16
        %v678 = vadd.s32 %v675, 24
        %v679 = vadd.s32 %v675, 32
        %v680 = vadd.s32 %v675, 40
        %v681 = vadd.s32 %v675, 48
        %v682 = vadd.s32 %v675, 56
        %v683 = vadd.s32 %v675, 64
        %v684 = vadd.s32 %v675, 72
        %v685 = vadd.s32 %v675, 80
        %v686 = vadd.s32 %v675, 88
        %v687 = vadd.s32 %v675, 96
        %v688 = vadd.s32 %v675, 104
        %v689 = vadd.s32 %v675, 112
        %v690 = vadd.s32 %v675, 120
        %v691 = vmin.f32 %v642, %v646
        %v692 = vmin.f32 %v644, %v648
        %v693 = vmin.f32 %v691, %v650
        %v694 = vmin.f32 %v692, %v652
        %v695 = vmin.f32 %v693, %v654
        %v696 = vmin.f32 %v694, %v656
        %v697 = vmin.f32 %v695, %v658
        %v698 = vmin.f32 %v696, %v660
        %v699 = vmin.f32 %v697, %v662
        %v700 = vmin.f32 %v698, %v664
        %v701 = vmin.f32 %v699, %v666
        %v702 = vmin.f32 %v700, %v668
        %v703 = vmin.f32 %v701, %v670
        %v704 = vmin.f32 %v702, %v672
        %v705 = vmin.f32 %v703, %v704
        %v706 = vrot.slane %v705, 4
        %v707 = vmin.f32 %v705, %v706
        %v708 = vrot.slane %v707, 2
        %v709 = vmin.f32 %v707, %v708
        %v710 = vrot.slane %v709, 1
        %v711 = vmin.f32 %v709, %v710
        %v712 = vmin.f32 %v643, %v647
        %v713 = vmin.f32 %v645, %v649
        %v714 = vmin.f32 %v712, %v651
        %v715 = vmin.f32 %v713, %v653
        %v716 = vmin.f32 %v714, %v655
        %v717 = vmin.f32 %v715, %v657
        %v718 = vmin.f32 %v716, %v659
        %v719 = vmin.f32 %v717, %v661
        %v720 = vmin.f32 %v718, %v663
        %v721 = vmin.f32 %v719, %v665
        %v722 = vmin.f32 %v720, %v667
        %v723 = vmin.f32 %v721, %v669
        %v724 = vmin.f32 %v722, %v671
        %v725 = vmin.f32 %v723, %v673
        %v726 = vmin.f32 %v724, %v725
        %v727 = vrot.slane %v726, 4
        %v728 = vmin.f32 %v726, %v727
        %v729 = vrot.slane %v728, 2
        %v730 = vmin.f32 %v728, %v729
        %v731 = vrot.slane %v730, 1
        %v732 = vmin.f32 %v730, %v731
        %vm733 = vcmp.eq.f32.partialorder %v642, %v711
        %vm734 = vcmp.eq.f32.partialorder %v643, %v732
        %vm735 = vcmp.eq.f32.partialorder %v644, %v711
        %vm736 = vcmp.eq.f32.partialorder %v645, %v732
        %vm737 = vcmp.eq.f32.partialorder %v646, %v711
        %vm738 = vcmp.eq.f32.partialorder %v647, %v732
        %vm739 = vcmp.eq.f32.partialorder %v648, %v711
        %vm740 = vcmp.eq.f32.partialorder %v649, %v732
        %vm741 = vcmp.eq.f32.partialorder %v650, %v711
        %vm742 = vcmp.eq.f32.partialorder %v651, %v732
        %vm743 = vcmp.eq.f32.partialorder %v652, %v711
        %vm744 = vcmp.eq.f32.partialorder %v653, %v732
        %vm745 = vcmp.eq.f32.partialorder %v654, %v711
        %vm746 = vcmp.eq.f32.partialorder %v655, %v732
        %vm747 = vcmp.eq.f32.partialorder %v656, %v711
        %vm748 = vcmp.eq.f32.partialorder %v657, %v732
        %vm749 = vcmp.eq.f32.partialorder %v658, %v711
        %vm750 = vcmp.eq.f32.partialorder %v659, %v732
        %vm751 = vcmp.eq.f32.partialorder %v660, %v711
        %vm752 = vcmp.eq.f32.partialorder %v661, %v732
        %vm753 = vcmp.eq.f32.partialorder %v662, %v711
        %vm754 = vcmp.eq.f32.partialorder %v663, %v732
        %vm755 = vcmp.eq.f32.partialorder %v664, %v711
        %vm756 = vcmp.eq.f32.partialorder %v665, %v732
        %vm757 = vcmp.eq.f32.partialorder %v666, %v711
        %vm758 = vcmp.eq.f32.partialorder %v667, %v732
        %vm759 = vcmp.eq.f32.partialorder %v668, %v711
        %vm760 = vcmp.eq.f32.partialorder %v669, %v732
        %vm761 = vcmp.eq.f32.partialorder %v670, %v711
        %vm762 = vcmp.eq.f32.partialorder %v671, %v732
        %vm763 = vcmp.eq.f32.partialorder %v672, %v711
        %vm764 = vcmp.eq.f32.partialorder %v673, %v732
        %v765 = vsel %vm733, %v675, 128
        %v766 = vsel %vm734, %v675, 128
        %v767 = vsel %vm735, %v676, 128
        %v768 = vsel %vm736, %v676, 128
        %v769 = vsel %vm737, %v677, 128
        %v770 = vsel %vm738, %v677, 128
        %v771 = vsel %vm739, %v678, 128
        %v772 = vsel %vm740, %v678, 128
        %v773 = vsel %vm741, %v679, 128
        %v774 = vsel %vm742, %v679, 128
        %v775 = vsel %vm743, %v680, 128
        %v776 = vsel %vm744, %v680, 128
        %v777 = vsel %vm745, %v681, 128
        %v778 = vsel %vm746, %v681, 128
        %v779 = vsel %vm747, %v682, 128
        %v780 = vsel %vm748, %v682, 128
        %v781 = vsel %vm749, %v683, 128
        %v782 = vsel %vm750, %v683, 128
        %v783 = vsel %vm751, %v684, 128
        %v784 = vsel %vm752, %v684, 128
        %v785 = vsel %vm753, %v685, 128
        %v786 = vsel %vm754, %v685, 128
        %v787 = vsel %vm755, %v686, 128
        %v788 = vsel %vm756, %v686, 128
        %v789 = vsel %vm757, %v687, 128
        %v790 = vsel %vm758, %v687, 128
        %v791 = vsel %vm759, %v688, 128
        %v792 = vsel %vm760, %v688, 128
        %v793 = vsel %vm761, %v689, 128
        %v794 = vsel %vm762, %v689, 128
        %v795 = vsel %vm763, %v690, 128
        %v796 = vsel %vm764, %v690, 128
        %vm797 = vcmp.lt.s32.totalorder %v765, %v769
        %v798 = vsel %vm797, %v765, %v769
        %vm799 = vcmp.lt.s32.totalorder %v767, %v771
        %v800 = vsel %vm799, %v767, %v771
        %vm801 = vcmp.lt.s32.totalorder %v798, %v773
        %v802 = vsel %vm801, %v798, %v773
        %vm803 = vcmp.lt.s32.totalorder %v800, %v775
        %v804 = vsel %vm803, %v800, %v775
        %vm805 = vcmp.lt.s32.totalorder %v802, %v777
        %v806 = vsel %vm805, %v802, %v777
        %vm807 = vcmp.lt.s32.totalorder %v804, %v779
        %v808 = vsel %vm807, %v804, %v779
        %vm809 = vcmp.lt.s32.totalorder %v806, %v781
        %v810 = vsel %vm809, %v806, %v781
        %vm811 = vcmp.lt.s32.totalorder %v808, %v783
        %v812 = vsel %vm811, %v808, %v783
        %vm813 = vcmp.lt.s32.totalorder %v810, %v785
        %v814 = vsel %vm813, %v810, %v785
        %vm815 = vcmp.lt.s32.totalorder %v812, %v787
        %v816 = vsel %vm815, %v812, %v787
        %vm817 = vcmp.lt.s32.totalorder %v814, %v789
        %v818 = vsel %vm817, %v814, %v789
        %vm819 = vcmp.lt.s32.totalorder %v816, %v791
        %v820 = vsel %vm819, %v816, %v791
        %vm821 = vcmp.lt.s32.totalorder %v818, %v793
        %v822 = vsel %vm821, %v818, %v793
        %vm823 = vcmp.lt.s32.totalorder %v820, %v795
        %v824 = vsel %vm823, %v820, %v795
        %vm825 = vcmp.lt.s32.totalorder %v822, %v824
        %v826 = vsel %vm825, %v822, %v824
        %v827 = vrot.slane %v826, 4
        %vm828 = vcmp.lt.s32.totalorder %v826, %v827
        %v829 = vsel %vm828, %v826, %v827
        %v830 = vrot.slane %v829, 2
        %vm831 = vcmp.lt.s32.totalorder %v829, %v830
        %v832 = vsel %vm831, %v829, %v830
        %v833 = vrot.slane %v832, 1
        %vm834 = vcmp.lt.s32.totalorder %v832, %v833
        %v835 = vsel %vm834, %v832, %v833
        %vm836 = vcmp.lt.s32.totalorder %v766, %v770
        %v837 = vsel %vm836, %v766, %v770
        %vm838 = vcmp.lt.s32.totalorder %v768, %v772
        %v839 = vsel %vm838, %v768, %v772
        %vm840 = vcmp.lt.s32.totalorder %v837, %v774
        %v841 = vsel %vm840, %v837, %v774
        %vm842 = vcmp.lt.s32.totalorder %v839, %v776
        %v843 = vsel %vm842, %v839, %v776
        %vm844 = vcmp.lt.s32.totalorder %v841, %v778
        %v845 = vsel %vm844, %v841, %v778
        %vm846 = vcmp.lt.s32.totalorder %v843, %v780
        %v847 = vsel %vm846, %v843, %v780
        %vm848 = vcmp.lt.s32.totalorder %v845, %v782
        %v849 = vsel %vm848, %v845, %v782
        %vm850 = vcmp.lt.s32.totalorder %v847, %v784
        %v851 = vsel %vm850, %v847, %v784
        %vm852 = vcmp.lt.s32.totalorder %v849, %v786
        %v853 = vsel %vm852, %v849, %v786
        %vm854 = vcmp.lt.s32.totalorder %v851, %v788
        %v855 = vsel %vm854, %v851, %v788
        %vm856 = vcmp.lt.s32.totalorder %v853, %v790
        %v857 = vsel %vm856, %v853, %v790
        %vm858 = vcmp.lt.s32.totalorder %v855, %v792
        %v859 = vsel %vm858, %v855, %v792
        %vm860 = vcmp.lt.s32.totalorder %v857, %v794
        %v861 = vsel %vm860, %v857, %v794
        %vm862 = vcmp.lt.s32.totalorder %v859, %v796
        %v863 = vsel %vm862, %v859, %v796
        %vm864 = vcmp.lt.s32.totalorder %v861, %v863
        %v865 = vsel %vm864, %v861, %v863
        %v866 = vrot.slane %v865, 4
        %vm867 = vcmp.lt.s32.totalorder %v865, %v866
        %v868 = vsel %vm867, %v865, %v866
        %v869 = vrot.slane %v868, 2
        %vm870 = vcmp.lt.s32.totalorder %v868, %v869
        %v871 = vsel %vm870, %v868, %v869
        %v872 = vrot.slane %v871, 1
        %vm873 = vcmp.lt.s32.totalorder %v871, %v872
        %v874 = vsel %vm873, %v871, %v872
        %v875 = vcombine.low %v835, %v874
        %v877 = vunpack.c.l.s4 1966171168
        %v878 = vunpack.c.0.s8 %v877
        %v879 = vlaneseq
        %v880 = vshrl.u32 %v879, 7
        %v881 = vsub.s32 %v878, %v880
        %v882 = vrot.slane %v875, %v881
        %v884 = vunpack.c.l.s4 1966171168
        %v885 = vunpack.c.0.s8 %v884
        %v886 = vlaneseq
        %v887 = vshrl.u32 %v886, 7
        %v888 = vsub.s32 %v885, %v887
        %v889 = vrot.slane %v882, %v888
        %v890 = vlaneseq
        %vm891 = vcmp.ge.s32.totalorder %v890, 0
        %vm892 = vcmp.lt.s32.totalorder %v890, 256
        %vm893 = vmand %vm891, %vm892
        %894 = vst.msk [vmem:[%s284] sm:$0x3] %vm893, %v889
        %vm895 = vcmp.eq.s32.totalorder %v675, %v835
        %vm896 = vcmp.eq.s32.totalorder %v675, %v874
        %vm897 = vcmp.eq.s32.totalorder %v676, %v835
        %vm898 = vcmp.eq.s32.totalorder %v676, %v874
        %vm899 = vcmp.eq.s32.totalorder %v677, %v835
        %vm900 = vcmp.eq.s32.totalorder %v677, %v874
        %vm901 = vcmp.eq.s32.totalorder %v678, %v835
        %vm902 = vcmp.eq.s32.totalorder %v678, %v874
        %vm903 = vcmp.eq.s32.totalorder %v679, %v835
        %vm904 = vcmp.eq.s32.totalorder %v679, %v874
        %vm905 = vcmp.eq.s32.totalorder %v680, %v835
        %vm906 = vcmp.eq.s32.totalorder %v680, %v874
        %vm907 = vcmp.eq.s32.totalorder %v681, %v835
        %vm908 = vcmp.eq.s32.totalorder %v681, %v874
        %vm909 = vcmp.eq.s32.totalorder %v682, %v835
        %vm910 = vcmp.eq.s32.totalorder %v682, %v874
        %vm911 = vcmp.eq.s32.totalorder %v683, %v835
        %vm912 = vcmp.eq.s32.totalorder %v683, %v874
        %vm913 = vcmp.eq.s32.totalorder %v684, %v835
        %vm914 = vcmp.eq.s32.totalorder %v684, %v874
        %vm915 = vcmp.eq.s32.totalorder %v685, %v835
        %vm916 = vcmp.eq.s32.totalorder %v685, %v874
        %vm917 = vcmp.eq.s32.totalorder %v686, %v835
        %vm918 = vcmp.eq.s32.totalorder %v686, %v874
        %vm919 = vcmp.eq.s32.totalorder %v687, %v835
        %vm920 = vcmp.eq.s32.totalorder %v687, %v874
        %vm921 = vcmp.eq.s32.totalorder %v688, %v835
        %vm922 = vcmp.eq.s32.totalorder %v688, %v874
        %vm923 = vcmp.eq.s32.totalorder %v689, %v835
        %vm924 = vcmp.eq.s32.totalorder %v689, %v874
        %vm925 = vcmp.eq.s32.totalorder %v690, %v835
        %vm926 = vcmp.eq.s32.totalorder %v690, %v874
        %v927 = vsel %vm895, 1, 0
        %v928 = vsel %vm896, 1, 0
        %v929 = vsel %vm897, 1, 0
        %v930 = vsel %vm898, 1, 0
        %v931 = vsel %vm899, 1, 0
        %v932 = vsel %vm900, 1, 0
        %v933 = vsel %vm901, 1, 0
        %v934 = vsel %vm902, 1, 0
        %v935 = vsel %vm903, 1, 0
        %v936 = vsel %vm904, 1, 0
        %v937 = vsel %vm905, 1, 0
        %v938 = vsel %vm906, 1, 0
        %v939 = vsel %vm907, 1, 0
        %v940 = vsel %vm908, 1, 0
        %v941 = vsel %vm909, 1, 0
        %v942 = vsel %vm910, 1, 0
        %v943 = vsel %vm911, 1, 0
        %v944 = vsel %vm912, 1, 0
        %v945 = vsel %vm913, 1, 0
        %v946 = vsel %vm914, 1, 0
        %v947 = vsel %vm915, 1, 0
        %v948 = vsel %vm916, 1, 0
        %v949 = vsel %vm917, 1, 0
        %v950 = vsel %vm918, 1, 0
        %v951 = vsel %vm919, 1, 0
        %v952 = vsel %vm920, 1, 0
        %v953 = vsel %vm921, 1, 0
        %v954 = vsel %vm922, 1, 0
        %v955 = vsel %vm923, 1, 0
        %v956 = vsel %vm924, 1, 0
        %v957 = vsel %vm925, 1, 0
        %v958 = vsel %vm926, 1, 0
        %v959 = vcvt.s32.f32 %v927
        %v960 = vcvt.s32.f32 %v928
        %v961 = vcvt.s32.f32 %v929
        %v962 = vcvt.s32.f32 %v930
        %v963 = vcvt.s32.f32 %v931
        %v964 = vcvt.s32.f32 %v932
        %v965 = vcvt.s32.f32 %v933
        %v966 = vcvt.s32.f32 %v934
        %v967 = vcvt.s32.f32 %v935
        %v968 = vcvt.s32.f32 %v936
        %v969 = vcvt.s32.f32 %v937
        %v970 = vcvt.s32.f32 %v938
        %v971 = vcvt.s32.f32 %v939
        %v972 = vcvt.s32.f32 %v940
        %v973 = vcvt.s32.f32 %v941
        %v974 = vcvt.s32.f32 %v942
        %v975 = vcvt.s32.f32 %v943
        %v976 = vcvt.s32.f32 %v944
        %v977 = vcvt.s32.f32 %v945
        %v978 = vcvt.s32.f32 %v946
        %v979 = vcvt.s32.f32 %v947
        %v980 = vcvt.s32.f32 %v948
        %v981 = vcvt.s32.f32 %v949
        %v982 = vcvt.s32.f32 %v950
        %v983 = vcvt.s32.f32 %v951
        %v984 = vcvt.s32.f32 %v952
        %v985 = vcvt.s32.f32 %v953
        %v986 = vcvt.s32.f32 %v954
        %v987 = vcvt.s32.f32 %v955
        %v988 = vcvt.s32.f32 %v956
        %v989 = vcvt.s32.f32 %v957
        %v990 = vcvt.s32.f32 %v958
        %991 = vmatprep.subr.mxu0 %v960
        %992 = vmatpush1.msra.mxu0 %v959
        %993 = vmatprep.subr.mxu0 %v962
        %994 = vmatpush1.msra.mxu0 %v961
        %995 = vmatprep.subr.mxu0 %v964
        %996 = vmatpush1.msra.mxu0 %v963
        %997 = vmatprep.subr.mxu0 %v966
        %998 = vmatpush1.msra.mxu0 %v965
        %999 = vmatprep.subr.mxu0 %v968
        %1000 = vmatpush1.msra.mxu0 %v967
        %1001 = vmatprep.subr.mxu0 %v970
        %1002 = vmatpush1.msra.mxu0 %v969
        %1003 = vmatprep.subr.mxu0 %v972
        %1004 = vmatpush1.msra.mxu0 %v971
        %1005 = vmatprep.subr.mxu0 %v974
        %1006 = vmatpush1.msra.mxu0 %v973
        %1007 = vmatprep.subr.mxu0 %v976
        %1008 = vmatpush1.msra.mxu0 %v975
        %1009 = vmatprep.subr.mxu0 %v978
        %1010 = vmatpush1.msra.mxu0 %v977
        %1011 = vmatprep.subr.mxu0 %v980
        %1012 = vmatpush1.msra.mxu0 %v979
        %1013 = vmatprep.subr.mxu0 %v982
        %1014 = vmatpush1.msra.mxu0 %v981
        %1015 = vmatprep.subr.mxu0 %v984
        %1016 = vmatpush1.msra.mxu0 %v983
        %1017 = vmatprep.subr.mxu0 %v986
        %1018 = vmatpush1.msra.mxu0 %v985
        %1019 = vmatprep.subr.mxu0 %v988
        %1020 = vmatpush1.msra.mxu0 %v987
        %1021 = vmatprep.subr.mxu0 %v990
        %1022 = vmatpush1.msra.mxu0 %v989
        %1023 = vmatprep.subr.mxu0 0.0
        %1024 = vmatpush1.msra.mxu0 0.0
        %1025 = vmatprep.subr.mxu0 0.0
        %1026 = vmatpush1.msra.mxu0 0.0
        %1027 = vmatprep.subr.mxu0 0.0
        %1028 = vmatpush1.msra.mxu0 0.0
        %1029 = vmatprep.subr.mxu0 0.0
        %1030 = vmatpush1.msra.mxu0 0.0
        %1031 = vmatprep.subr.mxu0 0.0
        %1032 = vmatpush1.msra.mxu0 0.0
        %1033 = vmatprep.subr.mxu0 0.0
        %1034 = vmatpush1.msra.mxu0 0.0
        %1035 = vmatprep.subr.mxu0 0.0
        %1036 = vmatpush1.msra.mxu0 0.0
        %1037 = vmatprep.subr.mxu0 0.0
        %1038 = vmatpush1.msra.mxu0 0.0
        %1039 = vmatprep.subr.mxu0 0.0
        %1040 = vmatpush1.msra.mxu0 0.0
        %1041 = vmatprep.subr.mxu0 0.0
        %1042 = vmatpush1.msra.mxu0 0.0
        %1043 = vmatprep.subr.mxu0 0.0
        %1044 = vmatpush1.msra.mxu0 0.0
        %1045 = vmatprep.subr.mxu0 0.0
        %1046 = vmatpush1.msra.mxu0 0.0
        %1047 = vmatprep.subr.mxu0 0.0
        %1048 = vmatpush1.msra.mxu0 0.0
        %1049 = vmatprep.subr.mxu0 0.0
        %1050 = vmatpush1.msra.mxu0 0.0
        %1051 = vmatprep.subr.mxu0 0.0
        %1052 = vmatpush1.msra.mxu0 0.0
        %1053 = vmatprep.subr.mxu0 0.0
        %1054 = vmatpush1.msra.mxu0 0.0
        %1055 = vmatprep.mubr.f32.mxu0 0.0
        %1056 = vmatmul.mubr.f32.gmra.mrb[0].mxu0 %v328
        %v1057 = vpop.f32.mrb[0].mxu0
        %v1058 = vadd.f32 0.0, %v1057
        %v1059 = vpop.f32.mrb[0].mxu0
        %v1060 = vadd.f32 0.0, %v1059
        %1061 = vdwg.mxu0
        %v1064 = vcombine.low %v1058, %v1060
        %1066 = vst [vmem:[%s277] sm:$0xff] %v1064
        %v1068 = vsub.f32 %v1058, %v311
        %v1069 = vsub.f32 %v1060, %v346
        %s1070 = smul.u32 %s29, 256
        %v1071 = vlaneseq
        %v1072 = vand.u32 %v1071, 127
        %v1073 = vadd.s32 %v1072, 128
        %v1074 = vstv %s1070
        %v1075 = vadd.s32 %v1074, %v1072
        %v1076 = vadd.s32 %v1074, %v1073
        %v1077 = vmul.f32 %v1068, %v1068
        %v1078 = vmul.f32 %v1069, %v1069
        %v1079 = vsel %vm396, %v1077, 0.0
        %v1080 = vrot.slane %v1079, 4
        %v1081 = vadd.f32 %v1079, %v1080
        %v1082 = vrot.slane %v1081, 2
        %v1083 = vadd.f32 %v1081, %v1082
        %v1084 = vrot.slane %v1083, 1
        %v1085 = vadd.f32 %v1083, %v1084
        %v1086 = vsel %vm396, %v1078, 0.0
        %v1087 = vrot.slane %v1086, 4
        %v1088 = vadd.f32 %v1086, %v1087
        %v1089 = vrot.slane %v1088, 2
        %v1090 = vadd.f32 %v1088, %v1089
        %v1091 = vrot.slane %v1090, 1
        %v1092 = vadd.f32 %v1090, %v1091
        %vm1093 = vcmp.lt.s32.totalorder %v1075, 256
        %vm1094 = vcmp.lt.s32.totalorder %v1076, 256
        %v1095 = vsel %vm1093, %v1085, 0.0
        %v1096 = vsel %vm1094, %v1092, 0.0
        %v1097 = vadd.f32 %v1095, %v1096
        %1098 = vadd.xlane.f32.xlu0 %v1097
        %v1099 = vpop.xlane.xlu0 %1098
        %vm1100 = vcmask 0
        %1101 = vst.msk [vmem:[%s310] sm:$0x1] %vm1100, %v1099
        %s1102 = sand.u32 %s137, 1
        %s1103 = scalar_lea.sflag [#allocation3], %s1102
        %s1104 = sand.u32 %s137, 1
        %s1105 = smul.addr %s1104, 8
        %s1106 = scalar_lea.vmem [#allocation2], %s1105
        %s1107 = sand.u32 %s165, 1
        %s1108 = scalar_lea.sflag [#allocation5], %s1107
        %s1109 = sand.u32 %s165, 1
        %s1110 = smul.addr %s1109, 2
        %s1111 = scalar_lea.vmem [#allocation4], %s1110
        %p1112 = scmp.lt.s32.totalorder %s28, 1
        %s1113 = scalar_select %p1112, %s28, 1
        %p1114 = scmp.lt.s32.totalorder %s29, 0
        %s1115 = scalar_select %p1114, %s29, 0
        %s1116 = sadd.s32 %s1115, %s1113
        %s1117 = scalar_lea.vmem %s6, %s1116
        // Predicated region
        $region37: #{tpu_custom_call.1} parent=35 // pred_check
          %p1118 = pneg %p147
        $region38: #{tpu_custom_call.1} parent=35 // pred_check_branch
          %1120 = sbr.rel (%p1118) target = $region40
        $region39: #{tpu_custom_call.1} parent=35 // pred_region
          %s1121 = smul.u32 2, %s29
          %s1123 = ssub.s32 128, 128
          %1124 = vsyncadd %s1103, %s1123
          %s1125 = smul.addr %s28, 2
          %s1126 = sadd.s32 %s1121, %s1125
          %s1127 = smul.addr %s1126, 64
          %s1128 = scalar_lea.hbm %s4, %s1127
          %s1130 = sshll.u32 %s1106, 4
          %s1131 = int_to_ptr.vmem [resolvable:$true] %s1130
          %1133 = dma.vmem_to_hbm [thread:$0]  %s1131, 128, %s1128, %s1103
        $region40: #{tpu_custom_call.1} parent=35 // pred_fallthru
          _
        // Predicated region
        $region41: #{tpu_custom_call.1} parent=35 // pred_check
          %p1134 = pneg %p175
        $region42: #{tpu_custom_call.1} parent=35 // pred_check_branch
          %1136 = sbr.rel (%p1134) target = $region44
        $region43: #{tpu_custom_call.1} parent=35 // pred_region
          %s1137 = smul.u32 2, %s29
          %s1139 = ssub.s32 32, 32
          %1140 = vsyncadd %s1108, %s1139
          %s1141 = smul.addr %s28, 2
          %s1142 = sadd.s32 %s1137, %s1141
          %s1143 = smul.addr %s1142, 16
          %s1144 = scalar_lea.hbm %s5, %s1143
          %s1146 = sshll.u32 %s1111, 4
          %s1147 = int_to_ptr.vmem [resolvable:$true] %s1146
          %1149 = dma.vmem_to_hbm [thread:$0]  %s1147, 32, %s1144, %s1108
        $region44: #{tpu_custom_call.1} parent=35 // pred_fallthru
          _
        // Predicated region
        $region45: #{tpu_custom_call.1} parent=35 // pred_check
          %p1150 = pneg %p203
        $region46: #{tpu_custom_call.1} parent=35 // pred_check_branch
          %1152 = sbr.rel (%p1150) target = $region48
        $region47: #{tpu_custom_call.1} parent=35 // pred_region
          _
        $region48: #{tpu_custom_call.1} parent=35 // pred_fallthru
          _
      $region36: #{tpu_custom_call.1} parent=5 // pred_fallthru
        _
      %p1153 = scmp.le.s32.totalorder 2, %s19
      // Predicated region
      $region49: #{tpu_custom_call.1} parent=5 // pred_check
        %p1154 = pneg %p1153
      $region50: #{tpu_custom_call.1} parent=5 // pred_check_branch
        %1156 = sbr.rel (%p1154) target = $region52
      $region51: #{tpu_custom_call.1} parent=5 // pred_region
        %s1157 = ssub.s32 %s19, 2
        // Predicated region
        $region53: #{tpu_custom_call.1} parent=51 // pred_check
          %p1158 = pneg %p153
        $region54: #{tpu_custom_call.1} parent=51 // pred_check_branch
          %1160 = sbr.rel (%p1158) target = $region56
        $region55: #{tpu_custom_call.1} parent=51 // pred_region
          %s1161 = sand.u32 %s138, 1
          %s1162 = scalar_lea.sflag [#allocation3], %s1161
          %s1163 = sand.u32 %s138, 1
          %s1164 = smul.addr %s1163, 8
          %s1165 = scalar_lea.vmem [#allocation2], %s1164
          %1166 = dma.done %s1162, 128
        $region56: #{tpu_custom_call.1} parent=51 // pred_fallthru
          _
        // Predicated region
        $region57: #{tpu_custom_call.1} parent=51 // pred_check
          %p1167 = pneg %p181
        $region58: #{tpu_custom_call.1} parent=51 // pred_check_branch
          %1169 = sbr.rel (%p1167) target = $region60
        $region59: #{tpu_custom_call.1} parent=51 // pred_region
          %s1170 = sand.u32 %s166, 1
          %s1171 = scalar_lea.sflag [#allocation5], %s1170
          %s1172 = sand.u32 %s166, 1
          %s1173 = smul.addr %s1172, 2
          %s1174 = scalar_lea.vmem [#allocation4], %s1173
          %1175 = dma.done %s1171, 32
        $region60: #{tpu_custom_call.1} parent=51 // pred_fallthru
          _
        // Predicated region
        $region61: #{tpu_custom_call.1} parent=51 // pred_check
          %p1176 = pneg %p209
        $region62: #{tpu_custom_call.1} parent=51 // pred_check_branch
          %1178 = sbr.rel (%p1176) target = $region64
        $region63: #{tpu_custom_call.1} parent=51 // pred_region
          %p1179 = scmp.lt.s32.totalorder %s30, 1
          %s1180 = scalar_select %p1179, %s30, 1
          %p1181 = scmp.lt.s32.totalorder %s31, 0
          %s1182 = scalar_select %p1181, %s31, 0
          %s1183 = sadd.s32 %s1182, %s1180
          %s1184 = scalar_lea.vmem %s6, %s1183
        $region64: #{tpu_custom_call.1} parent=51 // pred_fallthru
          _
      $region52: #{tpu_custom_call.1} parent=5 // pred_fallthru
        _
    $region6: #{tpu_custom_call.1} parent=1 // loop_footer
      %s23 = sadd.s32 1, %s19
    $region7: #{tpu_custom_call.1} parent=1 // loop_footer_branch
      %18 = sbr.rel target = $region3
    $region8: #{tpu_custom_call.1} parent=1 // loop_exit
      _
    %1185 = vsyncpa [#allocation3], 1
    %s1186 = scalar_lea.sflag [#allocation3], 1
    %1187 = vsyncpa %s1186, 1
    %1188 = vsyncpa [#allocation5], 1
    %s1189 = scalar_lea.sflag [#allocation5], 1
    %1190 = vsyncpa %s1189, 1

</llo_original>
